<compile_context>
chip_gen: v6e
topology: v6e:2x2x1
jax: 0.10.0
libtpu: 0.0.40
codegen_flags: <defaults>
</compile_context>

<pallas_src>
import functools

import jax
import jax.numpy as jnp
from jax.experimental import pallas as pl
from jax.experimental.pallas import tpu as pltpu


def _conv_bn_silu_kernel(x_ref, w_ref, b_ref, o_ref, xp_ref, *, p, hstride):
    # x_ref : (N, H, W*Cin)          bf16 unpadded NHWC rows, (W,Cin) on lanes
    # w_ref : (K, W*Cin, Wout*Cout)  bf16 BN-scaled Toeplitz weights (W-pad folded in)
    # b_ref : (1, Wout*Cout)         f32 BN bias, lane-tiled
    # o_ref : (N, Hout, Wout*Cout)   f32 output slab (lane-dense == NHWC)
    # xp_ref: (N*hstride, W*Cin)     bf16 scratch: H-zero-padded rows, images stacked
    N, H, _ = x_ref.shape
    K = w_ref.shape[0]
    Hout = o_ref.shape[1]

    # Fold the H zero-padding into VMEM (no jnp.pad HBM round trip). Images are
    # stacked at a sublane-aligned stride so the output extraction stays 8-row
    # aligned.
    xp_ref[...] = jnp.zeros_like(xp_ref)
    for n in range(N):                                    # static unroll, N small
        xp_ref[pl.ds(n * hstride + p, H), :] = x_ref[n]

    # Batch folded into the matmul M dimension: K shifted views of the stacked
    # padded slab against the lane-dense (rows, Wout*Cout) f32 accumulator.
    rows = (N - 1) * hstride + Hout
    acc = jnp.zeros((rows, o_ref.shape[2]), jnp.float32)
    for dy in range(K):                                   # static unroll, K = 3
        acc += jnp.dot(xp_ref[pl.ds(dy, rows), :], w_ref[dy],
                       preferred_element_type=jnp.float32)

    # Fused BatchNorm bias (scale already folded into weights) + SiLU.
    # Divide goes to the EUP via the approximate reciprocal.
    y = acc + b_ref[...]
    z = y * pl.reciprocal(1.0 + jnp.exp(-y), approx=True)

    for n in range(N):                                    # drop inter-image rows
        o_ref[n] = z[n * hstride:n * hstride + Hout, :].astype(o_ref.dtype)


def make_conv_bn_silu_params(w_oihw, gamma, beta, run_mean, run_var, *, k, p, w_in):
    """Precompute once (inference constants): BN fold + W-block-Toeplitz weights.

    The W-direction zero padding is folded into the operator, so the kernel
    consumes the UNPADDED input width.
      w_toep[dy, wi*Cin+ci, wo*Cout+co] = w[dy, wi-wo+p, ci, co]*scale[co]
                                          (0 when wi-wo+p is outside [0, k)).
    """
    eps = 1e-3  # matches torch.nn.BatchNorm2d(out_ch, 0.001, 0.03)
    scale = gamma * jax.lax.rsqrt(run_var + eps)                 # (Cout,)
    bias = beta - run_mean * scale                               # (Cout,)

    w_hwio = jnp.transpose(w_oihw, (2, 3, 1, 0)) * scale[None, None, None, :]
    cin, cout = w_hwio.shape[2], w_hwio.shape[3]
    w_out = w_in + 2 * p - k + 1                                 # stride 1

    dx = jnp.arange(w_in)[:, None] - jnp.arange(w_out)[None, :] + p   # (Win, Wout)
    valid = (dx >= 0) & (dx < k)
    taps = w_hwio[:, jnp.clip(dx, 0, k - 1), :, :]               # (k, Win, Wout, Cin, Cout)
    taps = jnp.where(valid[None, :, :, None, None], taps, 0.0)
    w_toep = jnp.transpose(taps, (0, 1, 3, 2, 4))                # (k, Win, Cin, Wout, Cout)
    w_toep = w_toep.reshape(k, w_in * cin, w_out * cout).astype(jnp.bfloat16)

    # NOTE: assumes Wout*Cout is lane-dense (here 16*8 = 128) so stores are
    # full-width; other width/channel combos need a re-derived bias layout.
    bias_lane = jnp.tile(bias, (w_out,)).reshape(1, w_out * cout).astype(jnp.float32)
    return w_toep, bias_lane


@functools.partial(jax.jit, static_argnames=("p",))
def conv_bn_silu_apply(x_nchw, w_toep, bias_lane, *, p):
    N, Cin, H, W = x_nchw.shape
    k, wcin, wcout = w_toep.shape
    assert wcin == W * Cin
    Hout = H + 2 * p - k + 1                                     # stride 1
    Wout = W + 2 * p - k + 1
    Cout = wcout // Wout
    Hp = H + 2 * p
    hstride = -(-Hp // 8) * 8          # sublane-aligned per-image row stride

    # TODO(synk): NCHW<->NHWC glue kept because the module's external layout is
    # NCHW; drop it (and emit bf16) when neighbours consume NHWC/bf16 directly.
    x = jnp.transpose(x_nchw, (0, 2, 3, 1)).reshape(N, H, W * Cin)
    x = x.astype(jnp.bfloat16)

    kernel = functools.partial(_conv_bn_silu_kernel, p=p, hstride=hstride)
    out = pl.pallas_call(
        kernel,
        out_shape=jax.ShapeDtypeStruct((N, Hout, Wout * Cout), jnp.float32),
        grid_spec=pltpu.PrefetchScalarGridSpec(
            num_scalar_prefetch=0,
            grid=(1,),
            in_specs=[
                pl.BlockSpec((N, H, W * Cin), lambda i: (0, 0, 0)),
                pl.BlockSpec((k, W * Cin, Wout * Cout), lambda i: (0, 0, 0)),
                pl.BlockSpec((1, Wout * Cout), lambda i: (0, 0)),
            ],
            out_specs=pl.BlockSpec((N, Hout, Wout * Cout), lambda i: (0, 0, 0)),
            scratch_shapes=[pltpu.VMEM((N * hstride, W * Cin), jnp.bfloat16)],
        ),
        compiler_params=pltpu.CompilerParams(
            dimension_semantics=("arbitrary",)),
    )(x, w_toep, bias_lane)

    out = out.reshape(N, Hout, Wout, Cout)                       # free (same layout)
    return jnp.transpose(out, (0, 3, 1, 2))                      # NHWC -> NCHW


def _reference(x_nchw, w_oihw, gamma, beta, run_mean, run_var, *, p,
               operand_dtype=jnp.float32):
    eps = 1e-3
    scale = gamma * jax.lax.rsqrt(run_var + eps)
    bias = beta - run_mean * scale
    w_scaled = w_oihw * scale[:, None, None, None]
    x_op = x_nchw.astype(operand_dtype).astype(jnp.float32)
    w_op = w_scaled.astype(operand_dtype).astype(jnp.float32)
    y = jax.lax.conv_general_dilated(
        x_op, w_op, window_strides=(1, 1),
        padding=[(p, p), (p, p)],
        dimension_numbers=("NCHW", "OIHW", "NCHW"),
        precision=jax.lax.Precision.HIGHEST)
    y = y + bias[None, :, None, None]
    return y * jax.nn.sigmoid(y)


if __name__ == "__main__":
    # Module config: Conv(in_ch=4, out_ch=8, k=3, s=1, p=None -> 1, g=1, silu_opt=0)
    N, Cin, H, W = 2, 4, 16, 16
    Cout, k = 8, 3
    p = k // 2

    key = jax.random.PRNGKey(0)
    kx, kw, kg, kb, km, kv = jax.random.split(key, 6)

    x = jax.random.normal(kx, (N, Cin, H, W), dtype=jnp.float32)
    w = jax.random.normal(kw, (Cout, Cin, k, k), dtype=jnp.float32) * 0.1
    gamma = 1.0 + 0.1 * jax.random.normal(kg, (Cout,), dtype=jnp.float32)
    beta = 0.1 * jax.random.normal(kb, (Cout,), dtype=jnp.float32)
    run_mean = 0.1 * jax.random.normal(km, (Cout,), dtype=jnp.float32)
    run_var = jnp.abs(jax.random.normal(kv, (Cout,), dtype=jnp.float32)) + 0.5

    # One-time parameter prep (hoisted out of the per-call path).
    w_toep, bias_lane = make_conv_bn_silu_params(
        w, gamma, beta, run_mean, run_var, k=k, p=p, w_in=W)

    out = conv_bn_silu_apply(x, w_toep, bias_lane, p=p)
    out = jax.block_until_ready(out)
    assert out.shape == (N, Cout, H, W)

    # Check against a reference using the same bf16-quantized operands
    # (f32 accumulation); small slack for the EUP approximate reciprocal in SiLU.
    ref_bf16 = _reference(x, w, gamma, beta, run_mean, run_var, p=p,
                          operand_dtype=jnp.bfloat16)
    assert jnp.allclose(out, ref_bf16, atol=2e-2, rtol=2e-2), "mismatch vs bf16 ref"

    # Loose check against the full-f32 module semantics (difference is the
    # intentional bf16 operand quantization for the MXU).
    ref_f32 = _reference(x, w, gamma, beta, run_mean, run_var, p=p)
    assert jnp.allclose(out, ref_f32, atol=5e-2, rtol=5e-2), "mismatch vs f32 ref"

    print("KERNEL_OK")
</pallas_src>

<mosaic_0001>
module attributes {stable_mosaic.version = 11 : i64} {
  func.func @_conv_bn_silu_kernel(%arg0: i32, %arg1: memref<2x16x64xbf16, #tpu.memory_space<vmem>>, %arg2: memref<3x64x128xbf16, #tpu.memory_space<vmem>>, %arg3: memref<1x128xf32, #tpu.memory_space<vmem>>, %arg4: memref<2x16x128xf32, #tpu.memory_space<vmem>>, %arg5: memref<48x64xbf16, #tpu.memory_space<vmem>>) attributes {dimension_semantics = [#tpu.dimension_semantics<arbitrary>], iteration_bounds = array<i64: 1>, scalar_prefetch = 0 : i64, scratch_operands = 1 : i64, tpu.core_type = #tpu.core_type<tc>, window_params = [{pipeline_mode = #tpu.pipeline_mode<synchronous>, transform_indices = @transform_0, window_bounds = array<i64: 2, 16, 64>}, {pipeline_mode = #tpu.pipeline_mode<synchronous>, transform_indices = @transform_1, window_bounds = array<i64: 3, 64, 128>}, {pipeline_mode = #tpu.pipeline_mode<synchronous>, transform_indices = @transform_2, window_bounds = array<i64: 1, 128>}, {pipeline_mode = #tpu.pipeline_mode<synchronous>, transform_indices = @transform_3, window_bounds = array<i64: 2, 16, 128>}]} {
    %cst = arith.constant 0.000000e+00 : bf16
    %0 = vector.broadcast %cst : bf16 to vector<48x64xbf16>
    %c0 = arith.constant 0 : index
    %c0_0 = arith.constant 0 : index
    %1 = vector.load %arg5[%c0, %c0_0] : memref<48x64xbf16, #tpu.memory_space<vmem>>, vector<48x64xbf16>
    tpu.vector_store %arg5[%c0, %c0_0], %0 {strides = array<i32>} : memref<48x64xbf16, #tpu.memory_space<vmem>>, vector<48x64xbf16>,
    %c0_1 = arith.constant 0 : index
    %c0_2 = arith.constant 0 : index
    %c0_3 = arith.constant 0 : index
    %2 = vector.load %arg1[%c0_1, %c0_2, %c0_3] : memref<2x16x64xbf16, #tpu.memory_space<vmem>>, vector<1x16x64xbf16>
    %3 = vector.shape_cast %2 : vector<1x16x64xbf16> to vector<16x64xbf16>
    %c1 = arith.constant 1 : index
    %c0_4 = arith.constant 0 : index
    %4 = vector.load %arg5[%c1, %c0_4] : memref<48x64xbf16, #tpu.memory_space<vmem>>, vector<16x64xbf16>
    tpu.vector_store %arg5[%c1, %c0_4], %3 {strides = array<i32>} : memref<48x64xbf16, #tpu.memory_space<vmem>>, vector<16x64xbf16>,
    %c1_5 = arith.constant 1 : index
    %c0_6 = arith.constant 0 : index
    %c0_7 = arith.constant 0 : index
    %5 = vector.load %arg1[%c1_5, %c0_6, %c0_7] : memref<2x16x64xbf16, #tpu.memory_space<vmem>>, vector<1x16x64xbf16>
    %6 = vector.shape_cast %5 : vector<1x16x64xbf16> to vector<16x64xbf16>
    %c25 = arith.constant 25 : index
    %c0_8 = arith.constant 0 : index
    %7 = vector.load %arg5[%c25, %c0_8] : memref<48x64xbf16, #tpu.memory_space<vmem>>, vector<16x64xbf16>
    tpu.vector_store %arg5[%c25, %c0_8], %6 {strides = array<i32>} : memref<48x64xbf16, #tpu.memory_space<vmem>>, vector<16x64xbf16>,
    %cst_9 = arith.constant 0.000000e+00 : f32
    %8 = vector.broadcast %cst_9 : f32 to vector<40x128xf32>
    %c0_10 = arith.constant 0 : index
    %c0_11 = arith.constant 0 : index
    %9 = vector.load %arg5[%c0_10, %c0_11] : memref<48x64xbf16, #tpu.memory_space<vmem>>, vector<40x64xbf16>
    %c0_12 = arith.constant 0 : index
    %c0_13 = arith.constant 0 : index
    %c0_14 = arith.constant 0 : index
    %10 = vector.load %arg2[%c0_12, %c0_13, %c0_14] : memref<3x64x128xbf16, #tpu.memory_space<vmem>>, vector<1x64x128xbf16>
    %11 = vector.shape_cast %10 : vector<1x64x128xbf16> to vector<64x128xbf16>
    %cst_15 = arith.constant dense<0.000000e+00> : vector<40x128xf32>
    %12 = tpu.matmul %9, %11, %cst_15 {dimension_numbers = #tpu.dot_dimension_numbers<[1], [0], [0], [1], [0, 0, 1, 1], [], []>} : vector<40x64xbf16>, vector<64x128xbf16>, vector<40x128xf32> -> vector<40x128xf32>
    %13 = arith.addf %8, %12 : vector<40x128xf32>
    %c1_16 = arith.constant 1 : index
    %c0_17 = arith.constant 0 : index
    %14 = vector.load %arg5[%c1_16, %c0_17] : memref<48x64xbf16, #tpu.memory_space<vmem>>, vector<40x64xbf16>
    %c1_18 = arith.constant 1 : index
    %c0_19 = arith.constant 0 : index
    %c0_20 = arith.constant 0 : index
    %15 = vector.load %arg2[%c1_18, %c0_19, %c0_20] : memref<3x64x128xbf16, #tpu.memory_space<vmem>>, vector<1x64x128xbf16>
    %16 = vector.shape_cast %15 : vector<1x64x128xbf16> to vector<64x128xbf16>
    %cst_21 = arith.constant dense<0.000000e+00> : vector<40x128xf32>
    %17 = tpu.matmul %14, %16, %cst_21 {dimension_numbers = #tpu.dot_dimension_numbers<[1], [0], [0], [1], [0, 0, 1, 1], [], []>} : vector<40x64xbf16>, vector<64x128xbf16>, vector<40x128xf32> -> vector<40x128xf32>
    %18 = arith.addf %13, %17 : vector<40x128xf32>
    %c2 = arith.constant 2 : index
    %c0_22 = arith.constant 0 : index
    %19 = vector.load %arg5[%c2, %c0_22] : memref<48x64xbf16, #tpu.memory_space<vmem>>, vector<40x64xbf16>
    %c2_23 = arith.constant 2 : index
    %c0_24 = arith.constant 0 : index
    %c0_25 = arith.constant 0 : index
    %20 = vector.load %arg2[%c2_23, %c0_24, %c0_25] : memref<3x64x128xbf16, #tpu.memory_space<vmem>>, vector<1x64x128xbf16>
    %21 = vector.shape_cast %20 : vector<1x64x128xbf16> to vector<64x128xbf16>
    %cst_26 = arith.constant dense<0.000000e+00> : vector<40x128xf32>
    %22 = tpu.matmul %19, %21, %cst_26 {dimension_numbers = #tpu.dot_dimension_numbers<[1], [0], [0], [1], [0, 0, 1, 1], [], []>} : vector<40x64xbf16>, vector<64x128xbf16>, vector<40x128xf32> -> vector<40x128xf32>
    %23 = arith.addf %18, %22 : vector<40x128xf32>
    %c0_27 = arith.constant 0 : index
    %c0_28 = arith.constant 0 : index
    %24 = vector.load %arg3[%c0_27, %c0_28] : memref<1x128xf32, #tpu.memory_space<vmem>>, vector<1x128xf32>
    %25 = vector.broadcast %24 : vector<1x128xf32> to vector<40x128xf32>
    %26 = arith.addf %23, %25 : vector<40x128xf32>
    %cst_29 = arith.constant 0.000000e+00 : f32
    %27 = vector.broadcast %cst_29 : f32 to vector<40x128xf32>
    %28 = arith.subf %27, %26 : vector<40x128xf32>
    %29 = math.exp %28 : vector<40x128xf32>
    %cst_30 = arith.constant 1.000000e+00 : f32
    %30 = vector.broadcast %cst_30 : f32 to vector<40x128xf32>
    %31 = arith.addf %30, %29 : vector<40x128xf32>
    %32 = tpu.reciprocal %31 {approx = true} : vector<40x128xf32> -> vector<40x128xf32>
    %33 = arith.mulf %26, %32 : vector<40x128xf32>
    %34 = vector.extract_strided_slice %33 {offsets = [0, 0], sizes = [16, 128], strides = [1, 1]} : vector<40x128xf32> to vector<16x128xf32>
    %c0_31 = arith.constant 0 : index
    %c0_32 = arith.constant 0 : index
    %c0_33 = arith.constant 0 : index
    %35 = vector.load %arg4[%c0_31, %c0_32, %c0_33] : memref<2x16x128xf32, #tpu.memory_space<vmem>>, vector<1x16x128xf32>
    %36 = vector.shape_cast %35 : vector<1x16x128xf32> to vector<16x128xf32>
    %37 = vector.shape_cast %34 : vector<16x128xf32> to vector<1x16x128xf32>
    tpu.vector_store %arg4[%c0_31, %c0_32, %c0_33], %37 {strides = array<i32>} : memref<2x16x128xf32, #tpu.memory_space<vmem>>, vector<1x16x128xf32>,
    %38 = vector.extract_strided_slice %33 {offsets = [24, 0], sizes = [16, 128], strides = [1, 1]} : vector<40x128xf32> to vector<16x128xf32>
    %c1_34 = arith.constant 1 : index
    %c0_35 = arith.constant 0 : index
    %c0_36 = arith.constant 0 : index
    %39 = vector.load %arg4[%c1_34, %c0_35, %c0_36] : memref<2x16x128xf32, #tpu.memory_space<vmem>>, vector<1x16x128xf32>
    %40 = vector.shape_cast %39 : vector<1x16x128xf32> to vector<16x128xf32>
    %41 = vector.shape_cast %38 : vector<16x128xf32> to vector<1x16x128xf32>
    tpu.vector_store %arg4[%c1_34, %c0_35, %c0_36], %41 {strides = array<i32>} : memref<2x16x128xf32, #tpu.memory_space<vmem>>, vector<1x16x128xf32>,
    return
  }
  func.func @transform_0(%arg0: i32) -> (i32, i32, i32) {
    %c0_i32 = arith.constant 0 : i32
    %c0_i32_0 = arith.constant 0 : i32
    %c0_i32_1 = arith.constant 0 : i32
    %c0_i32_2 = arith.constant 0 : i32
    return %c0_i32, %c0_i32_0, %c0_i32_1 : i32, i32, i32
  }
  func.func @transform_1(%arg0: i32) -> (i32, i32, i32) {
    %c0_i32 = arith.constant 0 : i32
    %c0_i32_0 = arith.constant 0 : i32
    %c0_i32_1 = arith.constant 0 : i32
    %c0_i32_2 = arith.constant 0 : i32
    return %c0_i32, %c0_i32_0, %c0_i32_1 : i32, i32, i32
  }
  func.func @transform_2(%arg0: i32) -> (i32, i32) {
    %c0_i32 = arith.constant 0 : i32
    %c0_i32_0 = arith.constant 0 : i32
    %c0_i32_1 = arith.constant 0 : i32
    return %c0_i32, %c0_i32_0 : i32, i32
  }
  func.func @transform_3(%arg0: i32) -> (i32, i32, i32) {
    %c0_i32 = arith.constant 0 : i32
    %c0_i32_0 = arith.constant 0 : i32
    %c0_i32_1 = arith.constant 0 : i32
    %c0_i32_2 = arith.constant 0 : i32
    return %c0_i32, %c0_i32_0, %c0_i32_1 : i32, i32, i32
  }
}

</mosaic_0001>

<llo_original>
// kernel: conv_bn_silu_apply.1
$region0: #{conv_bn_silu_apply.1}
  #allocation0 [shape = 'u32[]', space=smem, size = 0x4, offset = 0x4, fixed_abs, tag = 'smem constant byte address 0x4 - core index']
  #allocation1 [shape = 'u32[144,128]{1,0:T(1,128)}', space=vmem, size = 0x12000, scoped, tag = 'internal scratch']
  #allocation2 [shape = 'bf16[48,64]{1,0:T(8,128)(2,1)}', space=vmem, size = 0x3000, scoped, tag = 'scratch operand']
  %s0 = inlined_call_operand.vmem [shape: bf16[2,16,64], index: 0, kind: input, shape index: {}]
  %s1 = inlined_call_operand.vmem [shape: bf16[3,64,128], index: 1, kind: input, shape index: {}]
  %s2 = inlined_call_operand.vmem [shape: f32[1,128], index: 2, kind: input, shape index: {}]
  %s3 = inlined_call_operand.vmem [shape: f32[2,16,128], index: 3, kind: output, shape index: {}]
  %s4 = sld [smem:[#allocation0]]
  $region22: #{conv_bn_silu_apply.1} parent=0
    _
  %s6 = ssub.s32 1, %s4
  %s7 = scalar_select 0, %s6, %s4
  // Predicated region
  $region2: #{conv_bn_silu_apply.1} parent=0 // pred_check
    _
  $region3: #{conv_bn_silu_apply.1} parent=0 // pred_check_branch
    %9 = sbr.rel (0) target = $region5
  $region4: #{conv_bn_silu_apply.1} parent=0 // pred_region
    _
  $region5: #{conv_bn_silu_apply.1} parent=0 // pred_fallthru
    _
  // Predicated region
  $region6: #{conv_bn_silu_apply.1} parent=0 // pred_check
    _
  $region7: #{conv_bn_silu_apply.1} parent=0 // pred_check_branch
    %11 = sbr.rel (0) target = $region9
  $region8: #{conv_bn_silu_apply.1} parent=0 // pred_region
    _
  $region9: #{conv_bn_silu_apply.1} parent=0 // pred_fallthru
    _
  // Predicated region
  $region10: #{conv_bn_silu_apply.1} parent=0 // pred_check
    _
  $region11: #{conv_bn_silu_apply.1} parent=0 // pred_check_branch
    %13 = sbr.rel (0) target = $region13
  $region12: #{conv_bn_silu_apply.1} parent=0 // pred_region
    _
  $region13: #{conv_bn_silu_apply.1} parent=0 // pred_fallthru
    _
  %vm15 = vcmask 519168
  %16 = vst.msk [vmem:[#allocation2] sm:$0xf] %vm15, 0
  %17 = vst.msk [vmem:[#allocation2 + $0x4] sm:$0xf] %vm15, 0
  %18 = vst.msk [vmem:[#allocation2 + $0x8] sm:$0xf] %vm15, 0
  %19 = vst.msk [vmem:[#allocation2 + $0xc] sm:$0xf] %vm15, 0
  %20 = vst.msk [vmem:[#allocation2 + $0x10] sm:$0xf] %vm15, 0
  %21 = vst.msk [vmem:[#allocation2 + $0x14] sm:$0xf] %vm15, 0
  %v22 = vld [vmem:[%s0] sm:$0xf]
  %v23 = vld [vmem:[%s0 + $0x4] sm:$0xf]
  %vm24 = vsmask.f32 256
  %vm25 = vsmask.f32 4368
  %vm26 = vmor %vm24, %vm25
  %v28 = vshrl.u32 %v22, 16
  %v30 = vrot.slane %v28, 7
  %v31 = vshll.u32 %v22, 16
  %v33 = vor.u32 %v30, %v31
  %v34 = vrot.slane %v30, 4
  %v36 = vshrl.u32 %v23, 16
  %v38 = vrot.slane %v36, 7
  %v39 = vshll.u32 %v23, 16
  %v41 = vor.u32 %v38, %v39
  %v42 = vsel %vm26, %v34, %v41
  %v43 = vrot.slane %v38, 4
  %vm47 = vcmask 519168
  %vm48 = vsmask.f32 7938
  %vm49 = vmand %vm47, %vm48
  %v50 = vld [vmem:[#allocation2] sm:$0xf]
  %v51 = vsel %vm49, %v33, %v50
  %52 = vst [vmem:[#allocation2] sm:$0xf] %v51
  %53 = vst.msk [vmem:[#allocation2 + $0x4] sm:$0xf] %vm15, %v42
  %vm54 = vcmask 516096
  %vm55 = vmand %vm54, %vm24
  %v56 = vld [vmem:[#allocation2 + $0x8] sm:$0x1]
  %v57 = vsel %vm55, %v43, %v56
  %58 = vst [vmem:[#allocation2 + $0x8] sm:$0x1] %v57
  %s59 = scalar_lea.vmem %s0, 8
  %v60 = vld [vmem:[%s59] sm:$0xf]
  %v61 = vld [vmem:[%s59 + $0x4] sm:$0xf]
  %v63 = vshrl.u32 %v60, 16
  %v65 = vrot.slane %v63, 7
  %v66 = vshll.u32 %v60, 16
  %v68 = vor.u32 %v65, %v66
  %v69 = vrot.slane %v65, 4
  %v71 = vshrl.u32 %v61, 16
  %v73 = vrot.slane %v71, 7
  %v74 = vshll.u32 %v61, 16
  %v76 = vor.u32 %v73, %v74
  %v77 = vsel %vm26, %v69, %v76
  %v78 = vrot.slane %v73, 4
  %v82 = vld [vmem:[#allocation2 + $0xc] sm:$0xf]
  %v83 = vsel %vm49, %v68, %v82
  %84 = vst [vmem:[#allocation2 + $0xc] sm:$0xf] %v83
  %85 = vst.msk [vmem:[#allocation2 + $0x10] sm:$0xf] %vm15, %v77
  %v86 = vld [vmem:[#allocation2 + $0x14] sm:$0x1]
  %v87 = vsel %vm55, %v78, %v86
  %88 = vst [vmem:[#allocation2 + $0x14] sm:$0x1] %v87
  %v89 = vld [vmem:[#allocation2] sm:$0xf]
  %v90 = vld [vmem:[#allocation2 + $0x4] sm:$0xf]
  %v91 = vld [vmem:[#allocation2 + $0x8] sm:$0xf]
  %v92 = vld [vmem:[#allocation2 + $0xc] sm:$0xf]
  %v93 = vld [vmem:[#allocation2 + $0x10] sm:$0xf]
  %v94 = vld [vmem:[%s1] sm:$0xf]
  %v95 = vld [vmem:[%s1 + $0x4] sm:$0xf]
  %v96 = vld [vmem:[%s1 + $0x8] sm:$0xf]
  %v97 = vld [vmem:[%s1 + $0xc] sm:$0xf]
  %v98 = vld [vmem:[%s1 + $0x10] sm:$0xf]
  %v99 = vld [vmem:[%s1 + $0x14] sm:$0xf]
  %v100 = vld [vmem:[%s1 + $0x18] sm:$0xf]
  %v101 = vld [vmem:[%s1 + $0x1c] sm:$0xf]
  %v102 = vld [vmem:[#allocation2 + $0x14] sm:$0x1]
  %s103 = scalar_lea.vmem %s1, 32
  %v104 = vld [vmem:[%s103] sm:$0xf]
  %v105 = vld [vmem:[%s103 + $0x4] sm:$0xf]
  %v106 = vld [vmem:[%s103 + $0x8] sm:$0xf]
  %v107 = vld [vmem:[%s103 + $0xc] sm:$0xf]
  %v108 = vld [vmem:[%s103 + $0x10] sm:$0xf]
  %v109 = vld [vmem:[%s103 + $0x14] sm:$0xf]
  %v110 = vld [vmem:[%s103 + $0x18] sm:$0xf]
  %v111 = vld [vmem:[%s103 + $0x1c] sm:$0xf]
  %v118 = vunpack.c.l.b16 %v89
  %v119 = vunpack.c.l.b16 %v90
  %v120 = vunpack.c.l.b16 %v91
  %v121 = vunpack.c.l.b16 %v92
  %v122 = vunpack.c.l.b16 %v93
  %v123 = vunpack.c.l.b16 %v102
  %v124 = vpack.c.b16 %v119, %v118
  %v125 = vpack.c.b16 %v121, %v120
  %v126 = vpack.c.b16 %v123, %v122
  %vm127 = vsmask.f32 7424
  %v129 = vshrl.u32 %v124, 16
  %v131 = vshll.u32 %v124, 16
  %v133 = vrot.slane %v131, 1
  %v134 = vor.u32 %v129, %v133
  %v136 = vshll.u32 %v125, 16
  %v138 = vrot.slane %v136, 1
  %v139 = vsel %vm127, %v134, %v138
  %v140 = vshrl.u32 %v125, 16
  %v142 = vor.u32 %v140, %v138
  %v144 = vshll.u32 %v126, 16
  %v146 = vrot.slane %v144, 1
  %v147 = vsel %vm127, %v142, %v146
  %v148 = vshrl.u32 %v126, 16
  %v150 = vor.u32 %v148, %v146
  %v159 = vunpack.c.l.b16 %v104
  %v160 = vunpack.c.l.b16 %v105
  %v161 = vunpack.c.l.b16 %v106
  %v162 = vunpack.c.l.b16 %v107
  %v163 = vunpack.c.l.b16 %v108
  %v164 = vunpack.c.l.b16 %v109
  %v165 = vunpack.c.l.b16 %v110
  %v166 = vunpack.c.l.b16 %v111
  %v167 = vpack.c.b16 %v160, %v159
  %v168 = vpack.c.b16 %v162, %v161
  %v169 = vpack.c.b16 %v164, %v163
  %v170 = vpack.c.b16 %v166, %v165
  %vm175 = vcmask 523264
  %v177 = vsel %vm175, %v139, 0
  %v180 = vsel %vm175, %v147, 0
  %v183 = vsel %vm175, %v150, 0
  %185 = vmatprep.subr.bf16.mxu0 0
  %186 = vmatpush1.bf16.msra.mxu0 0
  %187 = vmatprep.subr.bf16.mxu0 0
  %188 = vmatpush1.bf16.msra.mxu0 0
  %189 = vmatprep.subr.bf16.mxu0 0
  %190 = vmatpush1.bf16.msra.mxu0 0
  %191 = vmatprep.subr.bf16.mxu0 0
  %192 = vmatpush1.bf16.msra.mxu0 0
  %193 = vmatprep.subr.bf16.mxu0 0
  %194 = vmatpush1.bf16.msra.mxu0 %v170
  %195 = vmatprep.subr.bf16.mxu0 0
  %196 = vmatpush1.bf16.msra.mxu0 %v169
  %197 = vmatprep.subr.bf16.mxu0 0
  %198 = vmatpush1.bf16.msra.mxu0 %v168
  %199 = vmatprep.subr.bf16.mxu0 0
  %200 = vmatpush1.bf16.msra.mxu0 %v167
  %201 = vmatprep.subr.bf16.mxu0 0
  %202 = vmatpush2.bf16.msra.mxu0 0
  %203 = vmatprep.subr.bf16.mxu0 0
  %204 = vmatpush2.bf16.msra.mxu0 0
  %205 = vmatprep.subr.bf16.mxu0 0
  %206 = vmatpush2.bf16.msra.mxu0 0
  %207 = vmatprep.subr.bf16.mxu0 0
  %208 = vmatpush2.bf16.msra.mxu0 0
  %209 = vmatprep.subr.bf16.mxu0 0
  %210 = vmatpush2.bf16.msra.mxu0 0
  %211 = vmatprep.subr.bf16.mxu0 0
  %212 = vmatpush2.bf16.msra.mxu0 0
  %213 = vmatprep.subr.bf16.mxu0 0
  %214 = vmatpush2.bf16.msra.mxu0 0
  %215 = vmatprep.subr.bf16.mxu0 0
  %216 = vmatpush2.bf16.msra.mxu0 0
  %217 = vmatprep.mubr.bf16.mxu0 0
  %218 = vmatmul.mubr.bf16.gmra.mxu0 %v177
  %v219 = vpop.f32.mrf.mxu0
  %v220 = vadd.f32 0.0, %v219
  %v221 = vpop.f32.mrf.mxu0
  %v222 = vpop.f32.mrf.mxu0
  %v223 = vadd.f32 0.0, %v222
  %v224 = vpop.f32.mrf.mxu0
  %225 = vmatprep.mubr.bf16.mxu0 0
  %226 = vmatmul.mubr.bf16.gmra.mxu0 %v180
  %v227 = vpop.f32.mrf.mxu0
  %v228 = vpop.f32.mrf.mxu0
  %v229 = vpop.f32.mrf.mxu0
  %v230 = vadd.f32 0.0, %v229
  %v231 = vpop.f32.mrf.mxu0
  %232 = vmatprep.mubr.bf16.mxu0 0
  %233 = vmatmul.mubr.bf16.gmra.mxu0 %v183
  %v234 = vpop.f32.mrf.mxu0
  %v235 = vadd.f32 0.0, %v234
  %v236 = vpop.f32.mrf.mxu0
  %v237 = vpop.f32.mrf.mxu0
  %v238 = vpop.f32.mrf.mxu0
  %239 = vdwg.mxu0
  %v240 = vpack.c.b16 %v122, %v122
  %v249 = vunpack.c.l.b16 %v94
  %v250 = vunpack.c.l.b16 %v95
  %v251 = vunpack.c.l.b16 %v96
  %v252 = vunpack.c.l.b16 %v97
  %v253 = vunpack.c.l.b16 %v98
  %v254 = vunpack.c.l.b16 %v99
  %v255 = vunpack.c.l.b16 %v100
  %v256 = vunpack.c.l.b16 %v101
  %v257 = vpack.c.b16 %v250, %v249
  %v258 = vpack.c.b16 %v252, %v251
  %v259 = vpack.c.b16 %v254, %v253
  %v260 = vpack.c.b16 %v256, %v255
  %v265 = vsel %vm175, %v124, 0
  %v267 = vsel %vm175, %v125, 0
  %v270 = vsel %vm175, %v240, 0
  %272 = vmatprep.subr.bf16.mxu0 0
  %273 = vmatpush1.bf16.msra.mxu0 0
  %274 = vmatprep.subr.bf16.mxu0 0
  %275 = vmatpush1.bf16.msra.mxu0 0
  %276 = vmatprep.subr.bf16.mxu0 0
  %277 = vmatpush1.bf16.msra.mxu0 0
  %278 = vmatprep.subr.bf16.mxu0 0
  %279 = vmatpush1.bf16.msra.mxu0 0
  %280 = vmatprep.subr.bf16.mxu0 0
  %281 = vmatpush1.bf16.msra.mxu0 %v260
  %282 = vmatprep.subr.bf16.mxu0 0
  %283 = vmatpush1.bf16.msra.mxu0 %v259
  %284 = vmatprep.subr.bf16.mxu0 0
  %285 = vmatpush1.bf16.msra.mxu0 %v258
  %286 = vmatprep.subr.bf16.mxu0 0
  %287 = vmatpush1.bf16.msra.mxu0 %v257
  %288 = vmatprep.subr.bf16.mxu0 0
  %289 = vmatpush2.bf16.msra.mxu0 0
  %290 = vmatprep.subr.bf16.mxu0 0
  %291 = vmatpush2.bf16.msra.mxu0 0
  %292 = vmatprep.subr.bf16.mxu0 0
  %293 = vmatpush2.bf16.msra.mxu0 0
  %294 = vmatprep.subr.bf16.mxu0 0
  %295 = vmatpush2.bf16.msra.mxu0 0
  %296 = vmatprep.subr.bf16.mxu0 0
  %297 = vmatpush2.bf16.msra.mxu0 0
  %298 = vmatprep.subr.bf16.mxu0 0
  %299 = vmatpush2.bf16.msra.mxu0 0
  %300 = vmatprep.subr.bf16.mxu0 0
  %301 = vmatpush2.bf16.msra.mxu0 0
  %302 = vmatprep.subr.bf16.mxu0 0
  %303 = vmatpush2.bf16.msra.mxu0 0
  %304 = vmatprep.mubr.bf16.mxu0 0
  %305 = vmatmul.mubr.bf16.gmra.mxu0 %v265
  %v306 = vpop.f32.mrf.mxu0
  %v307 = vadd.f32 %v220, %v306
  %v308 = vpop.f32.mrf.mxu0
  %v309 = vpop.f32.mrf.mxu0
  %v310 = vadd.f32 %v223, %v309
  %v311 = vpop.f32.mrf.mxu0
  %312 = vmatprep.mubr.bf16.mxu0 0
  %313 = vmatmul.mubr.bf16.gmra.mxu0 %v267
  %v314 = vpop.f32.mrf.mxu0
  %v315 = vpop.f32.mrf.mxu0
  %v316 = vpop.f32.mrf.mxu0
  %v317 = vadd.f32 %v230, %v316
  %v318 = vpop.f32.mrf.mxu0
  %319 = vmatprep.mubr.bf16.mxu0 0
  %320 = vmatmul.mubr.bf16.gmra.mxu0 %v270
  %v321 = vpop.f32.mrf.mxu0
  %v322 = vadd.f32 %v235, %v321
  %v323 = vpop.f32.mrf.mxu0
  %v324 = vpop.f32.mrf.mxu0
  %v325 = vpop.f32.mrf.mxu0
  %326 = vdwg.mxu0
  %v327 = vld [vmem:[#allocation2] sm:$0xe]
  %s328 = scalar_lea.vmem %s1, 64
  %v329 = vld [vmem:[%s328] sm:$0xf]
  %v330 = vld [vmem:[%s328 + $0x4] sm:$0xf]
  %v331 = vld [vmem:[%s328 + $0x8] sm:$0xf]
  %v332 = vld [vmem:[%s328 + $0xc] sm:$0xf]
  %v333 = vld [vmem:[%s328 + $0x10] sm:$0xf]
  %v334 = vld [vmem:[%s328 + $0x14] sm:$0xf]
  %v335 = vld [vmem:[%s328 + $0x18] sm:$0xf]
  %v336 = vld [vmem:[%s328 + $0x1c] sm:$0xf]
  %v338 = vunpack.c.l.b16 %v327
  %v339 = vpack.c.b16 %v119, %v338
  %vm340 = vcmask 1046528
  %v341 = vrot.slane %v339, 1
  %v342 = vrot.slane %v125, 1
  %v343 = vsel %vm340, %v341, %v342
  %v344 = vrot.slane %v126, 1
  %v345 = vsel %vm340, %v342, %v344
  %v354 = vunpack.c.l.b16 %v329
  %v355 = vunpack.c.l.b16 %v330
  %v356 = vunpack.c.l.b16 %v331
  %v357 = vunpack.c.l.b16 %v332
  %v358 = vunpack.c.l.b16 %v333
  %v359 = vunpack.c.l.b16 %v334
  %v360 = vunpack.c.l.b16 %v335
  %v361 = vunpack.c.l.b16 %v336
  %v362 = vpack.c.b16 %v355, %v354
  %v363 = vpack.c.b16 %v357, %v356
  %v364 = vpack.c.b16 %v359, %v358
  %v365 = vpack.c.b16 %v361, %v360
  %v371 = vsel %vm175, %v343, 0
  %v374 = vsel %vm175, %v345, 0
  %v377 = vsel %vm175, %v344, 0
  %379 = vmatprep.subr.bf16.mxu0 0
  %380 = vmatpush1.bf16.msra.mxu0 0
  %381 = vmatprep.subr.bf16.mxu0 0
  %382 = vmatpush1.bf16.msra.mxu0 0
  %383 = vmatprep.subr.bf16.mxu0 0
  %384 = vmatpush1.bf16.msra.mxu0 0
  %385 = vmatprep.subr.bf16.mxu0 0
  %386 = vmatpush1.bf16.msra.mxu0 0
  %387 = vmatprep.subr.bf16.mxu0 0
  %388 = vmatpush1.bf16.msra.mxu0 %v365
  %389 = vmatprep.subr.bf16.mxu0 0
  %390 = vmatpush1.bf16.msra.mxu0 %v364
  %391 = vmatprep.subr.bf16.mxu0 0
  %392 = vmatpush1.bf16.msra.mxu0 %v363
  %393 = vmatprep.subr.bf16.mxu0 0
  %394 = vmatpush1.bf16.msra.mxu0 %v362
  %395 = vmatprep.subr.bf16.mxu0 0
  %396 = vmatpush2.bf16.msra.mxu0 0
  %397 = vmatprep.subr.bf16.mxu0 0
  %398 = vmatpush2.bf16.msra.mxu0 0
  %399 = vmatprep.subr.bf16.mxu0 0
  %400 = vmatpush2.bf16.msra.mxu0 0
  %401 = vmatprep.subr.bf16.mxu0 0
  %402 = vmatpush2.bf16.msra.mxu0 0
  %403 = vmatprep.subr.bf16.mxu0 0
  %404 = vmatpush2.bf16.msra.mxu0 0
  %405 = vmatprep.subr.bf16.mxu0 0
  %406 = vmatpush2.bf16.msra.mxu0 0
  %407 = vmatprep.subr.bf16.mxu0 0
  %408 = vmatpush2.bf16.msra.mxu0 0
  %409 = vmatprep.subr.bf16.mxu0 0
  %410 = vmatpush2.bf16.msra.mxu0 0
  %411 = vmatprep.mubr.bf16.mxu0 0
  %412 = vmatmul.mubr.bf16.gmra.mxu0 %v371
  %v413 = vpop.f32.mrf.mxu0
  %v414 = vadd.f32 0.0, %v413
  %v415 = vpop.f32.mrf.mxu0
  %v416 = vpop.f32.mrf.mxu0
  %v417 = vadd.f32 0.0, %v416
  %v418 = vpop.f32.mrf.mxu0
  %419 = vmatprep.mubr.bf16.mxu0 0
  %420 = vmatmul.mubr.bf16.gmra.mxu0 %v374
  %v421 = vpop.f32.mrf.mxu0
  %v422 = vpop.f32.mrf.mxu0
  %v423 = vpop.f32.mrf.mxu0
  %v424 = vadd.f32 0.0, %v423
  %v425 = vpop.f32.mrf.mxu0
  %426 = vmatprep.mubr.bf16.mxu0 0
  %427 = vmatmul.mubr.bf16.gmra.mxu0 %v377
  %v428 = vpop.f32.mrf.mxu0
  %v429 = vadd.f32 0.0, %v428
  %v430 = vpop.f32.mrf.mxu0
  %v431 = vpop.f32.mrf.mxu0
  %v432 = vpop.f32.mrf.mxu0
  %433 = vdwg.mxu0
  %v434 = vadd.f32 %v307, %v414
  %v435 = vadd.f32 %v310, %v417
  %v436 = vadd.f32 %v317, %v424
  %v437 = vadd.f32 %v322, %v429
  %v438 = vld [vmem:[%s2] sm:$0x1]
  %v440 = vlaneseq
  %v441 = vshrl.u32 %v440, 7
  %v442 = vsub.s32 0, %v441
  %v443 = vrot.slane %v438, %v442
  %v445 = vadd.f32 %v434, %v443
  %v446 = vadd.f32 %v435, %v443
  %v447 = vadd.f32 %v436, %v443
  %v448 = vadd.f32 %v437, %v443
  %v449 = vsub.f32 0.0, %v445
  %v450 = vsub.f32 0.0, %v446
  %v451 = vsub.f32 0.0, %v447
  %v452 = vsub.f32 0.0, %v448
  %v453 = vmul.f32 %v449, 1.442695
  %v454 = vpow.pop %v453
  %v455 = vmul.f32 %v450, 1.442695
  %v456 = vpow.pop %v455
  %v457 = vmul.f32 %v451, 1.442695
  %v458 = vpow.pop %v457
  %v459 = vmul.f32 %v452, 1.442695
  %v460 = vpow.pop %v459
  %v461 = vadd.f32 %v454, 1.0
  %v462 = vadd.f32 %v456, 1.0
  %v463 = vadd.f32 %v458, 1.0
  %v464 = vadd.f32 %v460, 1.0
  %v465 = vrcp.pop %v461
  %v466 = vrcp.pop %v462
  %v467 = vrcp.pop %v463
  %v468 = vrcp.pop %v464
  %v469 = vmul.f32 %v445, %v465
  %v470 = vmul.f32 %v446, %v466
  %v471 = vmul.f32 %v447, %v467
  %v472 = vmul.f32 %v448, %v468
  %473 = vst [vmem:[%s3] sm:$0xff] %v469
  %474 = vst [vmem:[%s3 + $0x8] sm:$0xff] %v470
  %s475 = scalar_lea.vmem %s3, 16
  %476 = vst [vmem:[%s475] sm:$0xff] %v471
  %477 = vst [vmem:[%s475 + $0x8] sm:$0xff] %v472
  // Predicated region
  $region14: #{conv_bn_silu_apply.1} parent=0 // pred_check
    _
  $region15: #{conv_bn_silu_apply.1} parent=0 // pred_check_branch
    %479 = sbr.rel (0) target = $region17
  $region16: #{conv_bn_silu_apply.1} parent=0 // pred_region
    _
  $region17: #{conv_bn_silu_apply.1} parent=0 // pred_fallthru
    _
  // Predicated region
  $region18: #{conv_bn_silu_apply.1} parent=0 // pred_check
    _
  $region19: #{conv_bn_silu_apply.1} parent=0 // pred_check_branch
    %481 = sbr.rel (0) target = $region21
  $region20: #{conv_bn_silu_apply.1} parent=0 // pred_region
    _
  $region21: #{conv_bn_silu_apply.1} parent=0 // pred_fallthru
    _

</llo_original>
